<compile_context>
chip_gen: v7x
topology: tpu7x:2x2x1
jax: 0.10.0
libtpu: 0.0.40
codegen_flags: <defaults>
</compile_context>

<pallas_src>
import math

import jax
import jax.numpy as jnp
from jax.experimental import pallas as pl
from jax.experimental.pallas import tpu as pltpu


def _round_up(x: int, m: int) -> int:
    return ((x + m - 1) // m) * m


def _cdiv(a: int, b: int) -> int:
    return (a + b - 1) // b


# ----------------------------------------------------------------------------
# One-time parameter preparation (hoisted out of the per-step call).
# ----------------------------------------------------------------------------
def prepare_params(params, *, input_size, latent_size, hidden_size, num_layers):
    """Cast weights to bf16 (MXU operands, biases stay f32) and lane-pad hidden /
    output feature dims to multiples of 128 so activations are lane-dense.

    `params` layout: [w0, b0, w1, b1, ..., w_out, b_out] with w_i stored as
    (in_features, out_features) and b_i as (1, out_features).
    """
    k0 = input_size + latent_size
    h_pad = _round_up(hidden_size, 128)
    n_out = _round_up(latent_size, 128)

    def pad2(a, rows, cols):
        return jnp.pad(a, ((0, rows - a.shape[0]), (0, cols - a.shape[1])))

    ops = []
    # layer 0: (k0, H) -> (k0, h_pad)
    ops.append(pad2(params[0], k0, h_pad).astype(jnp.bfloat16))
    ops.append(pad2(params[1], 1, h_pad).astype(jnp.float32))
    # hidden layers 1..L-1: (H, H) -> (h_pad, h_pad)
    for i in range(1, num_layers):
        ops.append(pad2(params[2 * i], h_pad, h_pad).astype(jnp.bfloat16))
        ops.append(pad2(params[2 * i + 1], 1, h_pad).astype(jnp.float32))
    # output layer: (H, latent) -> (h_pad, n_out)
    ops.append(pad2(params[2 * num_layers], h_pad, n_out).astype(jnp.bfloat16))
    ops.append(pad2(params[2 * num_layers + 1], 1, n_out).astype(jnp.float32))

    weights_bytes = int(sum(op.size * jnp.dtype(op.dtype).itemsize for op in ops))
    return {
        "ops": ops,
        "input_size": input_size,
        "latent_size": latent_size,
        "num_layers": num_layers,
        "k0": k0,
        "h_pad": h_pad,
        "n_out": n_out,
        "weights_bytes": weights_bytes,
    }


# ----------------------------------------------------------------------------
# Kernel body: statically unrolled MLP layer chain.
# ----------------------------------------------------------------------------
def _make_kernel(num_layers: int, clip_value: float):
    """Arg order: (x_ref, w0, b0, ..., w_{L-1}, b_{L-1}, w_out, b_out, out_ref).

    x and weights arrive in bf16 (MXU operands, f32 accumulation); biases and
    the bias-add / relu / clip epilogue stay f32 (no bf16 VPU path on v5e).
    """

    def kernel(x_ref, *rest):
        out_ref = rest[-1]
        wb = rest[:-1]

        # layer 0 — concat + bf16 cast already done in the wrapper
        act = jnp.dot(x_ref[...], wb[0][...], preferred_element_type=jnp.float32)
        act = jnp.maximum(act + wb[1][...], 0.0)

        # hidden layers 1 .. num_layers-1 (lane-padded to h_pad wide)
        for i in range(1, num_layers):
            act = jnp.dot(act.astype(jnp.bfloat16), wb[2 * i][...],
                          preferred_element_type=jnp.float32)
            act = jnp.maximum(act + wb[2 * i + 1][...], 0.0)

        # output layer (lane-padded to n_out) + clamp
        out = jnp.dot(act.astype(jnp.bfloat16), wb[2 * num_layers][...],
                      preferred_element_type=jnp.float32) + wb[2 * num_layers + 1][...]
        out_ref[...] = jnp.clip(out, -clip_value, clip_value).astype(out_ref.dtype)

    return kernel


# ----------------------------------------------------------------------------
# Wrapper.
# ----------------------------------------------------------------------------
def clipped_node_cell(inp, hid, prepared, *, clip_value,
                      max_block_b=512, split_for_megacore=True):
    """Pallas wrapper.

    inp      : (..., input_size)  float32
    hid      : (..., latent_size) float32
    prepared : output of prepare_params (one-time bf16/pad weight prep)
    returns  : (..., latent_size) float32

    Any leading dims (e.g. (T, B, ...) ODE-solver stages / scan steps that are
    independent evaluations) are flattened into one batch so all evaluations run
    in a SINGLE pallas_call — one dispatch, weights resident across the grid.
    """
    input_size = prepared["input_size"]
    latent_size = prepared["latent_size"]
    num_layers = prepared["num_layers"]
    k0, h_pad, n_out = prepared["k0"], prepared["h_pad"], prepared["n_out"]
    wb = prepared["ops"]

    lead = inp.shape[:-1]
    assert hid.shape[:-1] == lead
    assert inp.shape[-1] == input_size and hid.shape[-1] == latent_size
    B = math.prod(lead) if lead else 1
    inp2 = inp.reshape(B, input_size)
    hid2 = hid.reshape(B, latent_size)

    # Concat once, directly in bf16 (cast fuses into the concat; halves x DMA).
    x = jnp.concatenate([inp2, hid2], axis=1).astype(jnp.bfloat16)

    # Batch tiling: biggest tile that fits (amortizes per-grid-step overhead on
    # v5e/v6e), but keep >=2 grid steps when possible so the "parallel" axis can
    # shard across both TensorCores on v7x.
    tm = min(_round_up(B, 8), max_block_b)
    if split_for_megacore and B >= 16 and _cdiv(B, tm) < 2:
        tm = _round_up(_cdiv(B, 2), 8)
    b_pad = _round_up(B, tm)
    if b_pad != B:
        x = jnp.pad(x, ((0, b_pad - B), (0, 0)))
    n_tiles = b_pad // tm

    kernel = _make_kernel(num_layers, float(clip_value))

    # Advisory cost estimate so XLA schedules surrounding ops around the call.
    flops = 2 * b_pad * (k0 * h_pad + (num_layers - 1) * h_pad * h_pad + h_pad * n_out)
    bytes_accessed = int(x.size) * 2 + prepared["weights_bytes"] + b_pad * n_out * 4
    cost = pl.CostEstimate(flops=flops, transcendentals=0,
                           bytes_accessed=bytes_accessed)

    # Explicit VMEM budget: resident weights (worst-case double-buffered) + a few
    # x/out/activation tiles + margin; capped at 64 MiB (v7x physical per-TC).
    tile_bytes = tm * k0 * 2 + tm * n_out * 4 + tm * h_pad * 4
    vmem_limit = int(min(64 << 20,
                         max(32 << 20,
                             2 * prepared["weights_bytes"] + 4 * tile_bytes + (8 << 20))))

    def run(single_buffer_weights):
        def const_spec(shape):
            # Weights/biases use a constant index_map (stay resident); Buffered(1)
            # avoids allocating a useless second buffer for them.
            if single_buffer_weights:
                return pl.BlockSpec(shape, lambda b: (0, 0),
                                    pipeline_mode=pl.Buffered(1))
            return pl.BlockSpec(shape, lambda b: (0, 0))

        in_specs = [pl.BlockSpec((tm, k0), lambda b: (b, 0))]
        in_specs += [const_spec(op.shape) for op in wb]

        return pl.pallas_call(
            kernel,
            grid=(n_tiles,),
            in_specs=in_specs,
            out_specs=pl.BlockSpec((tm, n_out), lambda b: (b, 0)),
            out_shape=jax.ShapeDtypeStruct((b_pad, n_out), jnp.float32),
            compiler_params=pltpu.CompilerParams(
                dimension_semantics=("parallel",),
                vmem_limit_bytes=vmem_limit,
            ),
            cost_estimate=cost,
        )(x, *wb)

    want_single_buffer = hasattr(pl, "Buffered")
    try:
        out = run(want_single_buffer)
    except Exception:
        if not want_single_buffer:
            raise
        out = run(False)  # fall back to default double-buffered weight specs

    # TODO(synk): when this cell is iterated in a sequential scan (state carry),
    # keep the lane-padded (b_pad, n_out) output between steps and slice to
    # (..., latent) only once at the end of the loop.
    out = out[:B, :latent_size]
    return out.reshape(*lead, latent_size) if lead else out.reshape(latent_size)


# ----------------------------------------------------------------------------
# Reference implementations + init.
# ----------------------------------------------------------------------------
def _init_params(key, input_size, latent_size, hidden_size, num_layers):
    """PyTorch-Linear-style init (uniform +/- 1/sqrt(fan_in)); (in, out) layout."""
    dims = [input_size + latent_size] + [hidden_size] * num_layers + [latent_size]
    params = []
    for i in range(len(dims) - 1):
        fan_in, fan_out = dims[i], dims[i + 1]
        bound = 1.0 / (fan_in ** 0.5)
        key, kw, kb = jax.random.split(key, 3)
        w = jax.random.uniform(kw, (fan_in, fan_out), jnp.float32, -bound, bound)
        b = jax.random.uniform(kb, (1, fan_out), jnp.float32, -bound, bound)
        params += [w, b]
    return params


def _reference_f32(inp, hid, params, num_layers, clip_value):
    """Pure-JAX f32 reference mirroring the PyTorch module."""
    x = jnp.concatenate([inp, hid], axis=1)
    for i in range(num_layers):
        x = jnp.maximum(x @ params[2 * i] + params[2 * i + 1], 0.0)
    return jnp.clip(x @ params[2 * num_layers] + params[2 * num_layers + 1],
                    -clip_value, clip_value)


def _reference_matched(inp, hid, params, num_layers, clip_value):
    """Reference mirroring the kernel's precision policy (bf16 x bf16 -> f32 acc)."""
    def mm(a, w):
        return jnp.dot(a.astype(jnp.bfloat16), w.astype(jnp.bfloat16),
                       preferred_element_type=jnp.float32)

    x = jnp.concatenate([inp, hid], axis=1).astype(jnp.bfloat16)
    for i in range(num_layers):
        x = jnp.maximum(mm(x, params[2 * i]) + params[2 * i + 1], 0.0)
    return jnp.clip(mm(x, params[2 * num_layers]) + params[2 * num_layers + 1],
                    -clip_value, clip_value)


if __name__ == "__main__":
    batch = 8
    input_size = 16
    latent_size = 32
    hidden_size = 64
    num_layers = 3
    clip_value = 5.0  # finite so the clamp path is exercised; inf also works

    key = jax.random.PRNGKey(0)
    k_inp, k_hid, k_par, k_it, k_ht = jax.random.split(key, 5)
    inp = jax.random.normal(k_inp, (batch, input_size), jnp.float32)
    hid = jax.random.normal(k_hid, (batch, latent_size), jnp.float32)
    params = _init_params(k_par, input_size, latent_size, hidden_size, num_layers)

    # One-time weight prep (hoisted out of the per-step call).
    prepared = prepare_params(params, input_size=input_size, latent_size=latent_size,
                              hidden_size=hidden_size, num_layers=num_layers)

    # --- single cell evaluation ------------------------------------------------
    out = clipped_node_cell(inp, hid, prepared, clip_value=clip_value)
    out = jax.block_until_ready(out)
    assert out.shape == (batch, latent_size)

    ref_matched = _reference_matched(inp, hid, params, num_layers, clip_value)
    assert jnp.allclose(out, ref_matched, atol=1e-4, rtol=1e-4), \
        "mismatch vs matched-precision reference"

    ref_f32 = _reference_f32(inp, hid, params, num_layers, clip_value)
    assert jnp.allclose(out, ref_f32, atol=1e-1, rtol=5e-2), \
        "mismatch vs f32 reference"

    # --- fused multi-evaluation path (T independent evaluations, ONE pallas_call)
    T = 4
    inp_t = jax.random.normal(k_it, (T, batch, input_size), jnp.float32)
    hid_t = jax.random.normal(k_ht, (T, batch, latent_size), jnp.float32)
    out_t = clipped_node_cell(inp_t, hid_t, prepared, clip_value=clip_value)
    out_t = jax.block_until_ready(out_t)
    assert out_t.shape == (T, batch, latent_size)

    ref_t = _reference_matched(inp_t.reshape(T * batch, input_size),
                               hid_t.reshape(T * batch, latent_size),
                               params, num_layers, clip_value
                               ).reshape(T, batch, latent_size)
    assert jnp.allclose(out_t, ref_t, atol=1e-4, rtol=1e-4), \
        "mismatch vs matched-precision reference (fused steps)"

    print("KERNEL_OK")
</pallas_src>

<mosaic_0001>
module attributes {stable_mosaic.version = 11 : i64} {
  func.func @kernel(%arg0: i32, %arg1: memref<8x48xbf16, #tpu.memory_space<vmem>>, %arg2: memref<48x128xbf16, #tpu.memory_space<vmem>>, %arg3: memref<1x128xf32, #tpu.memory_space<vmem>>, %arg4: memref<128x128xbf16, #tpu.memory_space<vmem>>, %arg5: memref<1x128xf32, #tpu.memory_space<vmem>>, %arg6: memref<128x128xbf16, #tpu.memory_space<vmem>>, %arg7: memref<1x128xf32, #tpu.memory_space<vmem>>, %arg8: memref<128x128xbf16, #tpu.memory_space<vmem>>, %arg9: memref<1x128xf32, #tpu.memory_space<vmem>>, %arg10: memref<8x128xf32, #tpu.memory_space<vmem>>) attributes {dimension_semantics = [#tpu.dimension_semantics<parallel>], iteration_bounds = array<i64: 1>, scalar_prefetch = 0 : i64, scratch_operands = 0 : i64, tpu.core_type = #tpu.core_type<tc>, window_params = [{transform_indices = @transform_0, window_bounds = array<i64: 8, 48>}, {pipeline_mode = #tpu.pipeline_mode<synchronous>, transform_indices = @transform_1, window_bounds = array<i64: 48, 128>}, {pipeline_mode = #tpu.pipeline_mode<synchronous>, transform_indices = @transform_2, window_bounds = array<i64: 1, 128>}, {pipeline_mode = #tpu.pipeline_mode<synchronous>, transform_indices = @transform_3, window_bounds = array<i64: 128, 128>}, {pipeline_mode = #tpu.pipeline_mode<synchronous>, transform_indices = @transform_4, window_bounds = array<i64: 1, 128>}, {pipeline_mode = #tpu.pipeline_mode<synchronous>, transform_indices = @transform_5, window_bounds = array<i64: 128, 128>}, {pipeline_mode = #tpu.pipeline_mode<synchronous>, transform_indices = @transform_6, window_bounds = array<i64: 1, 128>}, {pipeline_mode = #tpu.pipeline_mode<synchronous>, transform_indices = @transform_7, window_bounds = array<i64: 128, 128>}, {pipeline_mode = #tpu.pipeline_mode<synchronous>, transform_indices = @transform_8, window_bounds = array<i64: 1, 128>}, {transform_indices = @transform_9, window_bounds = array<i64: 8, 128>}]} {
    %c0 = arith.constant 0 : index
    %c0_0 = arith.constant 0 : index
    %0 = vector.load %arg1[%c0, %c0_0] : memref<8x48xbf16, #tpu.memory_space<vmem>>, vector<8x48xbf16>
    %c0_1 = arith.constant 0 : index
    %c0_2 = arith.constant 0 : index
    %1 = vector.load %arg2[%c0_1, %c0_2] : memref<48x128xbf16, #tpu.memory_space<vmem>>, vector<48x128xbf16>
    %cst = arith.constant dense<0.000000e+00> : vector<8x128xf32>
    %2 = tpu.matmul %0, %1, %cst {dimension_numbers = #tpu.dot_dimension_numbers<[1], [0], [0], [1], [0, 0, 1, 1], [], []>} : vector<8x48xbf16>, vector<48x128xbf16>, vector<8x128xf32> -> vector<8x128xf32>
    %c0_3 = arith.constant 0 : index
    %c0_4 = arith.constant 0 : index
    %3 = vector.load %arg3[%c0_3, %c0_4] : memref<1x128xf32, #tpu.memory_space<vmem>>, vector<1x128xf32>
    %4 = vector.broadcast %3 : vector<1x128xf32> to vector<8x128xf32>
    %5 = arith.addf %2, %4 : vector<8x128xf32>
    %cst_5 = arith.constant 0.000000e+00 : f32
    %6 = vector.broadcast %cst_5 : f32 to vector<8x128xf32>
    %7 = arith.maximumf %5, %6 : vector<8x128xf32>
    %8 = arith.truncf %7 : vector<8x128xf32> to vector<8x128xbf16>
    %c0_6 = arith.constant 0 : index
    %c0_7 = arith.constant 0 : index
    %9 = vector.load %arg4[%c0_6, %c0_7] : memref<128x128xbf16, #tpu.memory_space<vmem>>, vector<128x128xbf16>
    %cst_8 = arith.constant dense<0.000000e+00> : vector<8x128xf32>
    %10 = tpu.matmul %8, %9, %cst_8 {dimension_numbers = #tpu.dot_dimension_numbers<[1], [0], [0], [1], [0, 0, 1, 1], [], []>} : vector<8x128xbf16>, vector<128x128xbf16>, vector<8x128xf32> -> vector<8x128xf32>
    %c0_9 = arith.constant 0 : index
    %c0_10 = arith.constant 0 : index
    %11 = vector.load %arg5[%c0_9, %c0_10] : memref<1x128xf32, #tpu.memory_space<vmem>>, vector<1x128xf32>
    %12 = vector.broadcast %11 : vector<1x128xf32> to vector<8x128xf32>
    %13 = arith.addf %10, %12 : vector<8x128xf32>
    %cst_11 = arith.constant 0.000000e+00 : f32
    %14 = vector.broadcast %cst_11 : f32 to vector<8x128xf32>
    %15 = arith.maximumf %13, %14 : vector<8x128xf32>
    %16 = arith.truncf %15 : vector<8x128xf32> to vector<8x128xbf16>
    %c0_12 = arith.constant 0 : index
    %c0_13 = arith.constant 0 : index
    %17 = vector.load %arg6[%c0_12, %c0_13] : memref<128x128xbf16, #tpu.memory_space<vmem>>, vector<128x128xbf16>
    %cst_14 = arith.constant dense<0.000000e+00> : vector<8x128xf32>
    %18 = tpu.matmul %16, %17, %cst_14 {dimension_numbers = #tpu.dot_dimension_numbers<[1], [0], [0], [1], [0, 0, 1, 1], [], []>} : vector<8x128xbf16>, vector<128x128xbf16>, vector<8x128xf32> -> vector<8x128xf32>
    %c0_15 = arith.constant 0 : index
    %c0_16 = arith.constant 0 : index
    %19 = vector.load %arg7[%c0_15, %c0_16] : memref<1x128xf32, #tpu.memory_space<vmem>>, vector<1x128xf32>
    %20 = vector.broadcast %19 : vector<1x128xf32> to vector<8x128xf32>
    %21 = arith.addf %18, %20 : vector<8x128xf32>
    %cst_17 = arith.constant 0.000000e+00 : f32
    %22 = vector.broadcast %cst_17 : f32 to vector<8x128xf32>
    %23 = arith.maximumf %21, %22 : vector<8x128xf32>
    %24 = arith.truncf %23 : vector<8x128xf32> to vector<8x128xbf16>
    %c0_18 = arith.constant 0 : index
    %c0_19 = arith.constant 0 : index
    %25 = vector.load %arg8[%c0_18, %c0_19] : memref<128x128xbf16, #tpu.memory_space<vmem>>, vector<128x128xbf16>
    %cst_20 = arith.constant dense<0.000000e+00> : vector<8x128xf32>
    %26 = tpu.matmul %24, %25, %cst_20 {dimension_numbers = #tpu.dot_dimension_numbers<[1], [0], [0], [1], [0, 0, 1, 1], [], []>} : vector<8x128xbf16>, vector<128x128xbf16>, vector<8x128xf32> -> vector<8x128xf32>
    %c0_21 = arith.constant 0 : index
    %c0_22 = arith.constant 0 : index
    %27 = vector.load %arg9[%c0_21, %c0_22] : memref<1x128xf32, #tpu.memory_space<vmem>>, vector<1x128xf32>
    %28 = vector.broadcast %27 : vector<1x128xf32> to vector<8x128xf32>
    %29 = arith.addf %26, %28 : vector<8x128xf32>
    %cst_23 = arith.constant -5.000000e+00 : f32
    %cst_24 = arith.constant 5.000000e+00 : f32
    %30 = vector.broadcast %cst_23 : f32 to vector<8x128xf32>
    %31 = arith.maximumf %30, %29 : vector<8x128xf32>
    %32 = vector.broadcast %cst_24 : f32 to vector<8x128xf32>
    %33 = arith.minimumf %32, %31 : vector<8x128xf32>
    %c0_25 = arith.constant 0 : index
    %c0_26 = arith.constant 0 : index
    %34 = vector.load %arg10[%c0_25, %c0_26] : memref<8x128xf32, #tpu.memory_space<vmem>>, vector<8x128xf32>
    tpu.vector_store %arg10[%c0_25, %c0_26], %33 {strides = array<i32>} : memref<8x128xf32, #tpu.memory_space<vmem>>, vector<8x128xf32>,
    return
  }
  func.func @transform_0(%arg0: i32) -> (i32, i32) {
    %c0_i32 = arith.constant 0 : i32
    %c0_i32_0 = arith.constant 0 : i32
    return %arg0, %c0_i32 : i32, i32
  }
  func.func @transform_1(%arg0: i32) -> (i32, i32) {
    %c0_i32 = arith.constant 0 : i32
    %c0_i32_0 = arith.constant 0 : i32
    %c0_i32_1 = arith.constant 0 : i32
    return %c0_i32, %c0_i32_0 : i32, i32
  }
  func.func @transform_2(%arg0: i32) -> (i32, i32) {
    %c0_i32 = arith.constant 0 : i32
    %c0_i32_0 = arith.constant 0 : i32
    %c0_i32_1 = arith.constant 0 : i32
    return %c0_i32, %c0_i32_0 : i32, i32
  }
  func.func @transform_3(%arg0: i32) -> (i32, i32) {
    %c0_i32 = arith.constant 0 : i32
    %c0_i32_0 = arith.constant 0 : i32
    %c0_i32_1 = arith.constant 0 : i32
    return %c0_i32, %c0_i32_0 : i32, i32
  }
  func.func @transform_4(%arg0: i32) -> (i32, i32) {
    %c0_i32 = arith.constant 0 : i32
    %c0_i32_0 = arith.constant 0 : i32
    %c0_i32_1 = arith.constant 0 : i32
    return %c0_i32, %c0_i32_0 : i32, i32
  }
  func.func @transform_5(%arg0: i32) -> (i32, i32) {
    %c0_i32 = arith.constant 0 : i32
    %c0_i32_0 = arith.constant 0 : i32
    %c0_i32_1 = arith.constant 0 : i32
    return %c0_i32, %c0_i32_0 : i32, i32
  }
  func.func @transform_6(%arg0: i32) -> (i32, i32) {
    %c0_i32 = arith.constant 0 : i32
    %c0_i32_0 = arith.constant 0 : i32
    %c0_i32_1 = arith.constant 0 : i32
    return %c0_i32, %c0_i32_0 : i32, i32
  }
  func.func @transform_7(%arg0: i32) -> (i32, i32) {
    %c0_i32 = arith.constant 0 : i32
    %c0_i32_0 = arith.constant 0 : i32
    %c0_i32_1 = arith.constant 0 : i32
    return %c0_i32, %c0_i32_0 : i32, i32
  }
  func.func @transform_8(%arg0: i32) -> (i32, i32) {
    %c0_i32 = arith.constant 0 : i32
    %c0_i32_0 = arith.constant 0 : i32
    %c0_i32_1 = arith.constant 0 : i32
    return %c0_i32, %c0_i32_0 : i32, i32
  }
  func.func @transform_9(%arg0: i32) -> (i32, i32) {
    %c0_i32 = arith.constant 0 : i32
    %c0_i32_0 = arith.constant 0 : i32
    return %arg0, %c0_i32 : i32, i32
  }
}

module attributes {stable_mosaic.version = 11 : i64} {
  func.func @kernel(%arg0: i32, %arg1: memref<8x48xbf16, #tpu.memory_space<vmem>>, %arg2: memref<48x128xbf16, #tpu.memory_space<vmem>>, %arg3: memref<1x128xf32, #tpu.memory_space<vmem>>, %arg4: memref<128x128xbf16, #tpu.memory_space<vmem>>, %arg5: memref<1x128xf32, #tpu.memory_space<vmem>>, %arg6: memref<128x128xbf16, #tpu.memory_space<vmem>>, %arg7: memref<1x128xf32, #tpu.memory_space<vmem>>, %arg8: memref<128x128xbf16, #tpu.memory_space<vmem>>, %arg9: memref<1x128xf32, #tpu.memory_space<vmem>>, %arg10: memref<8x128xf32, #tpu.memory_space<vmem>>) attributes {dimension_semantics = [#tpu.dimension_semantics<parallel>], iteration_bounds = array<i64: 1>, scalar_prefetch = 0 : i64, scratch_operands = 0 : i64, tpu.core_type = #tpu.core_type<tc>, window_params = [{transform_indices = @transform_0, window_bounds = array<i64: 8, 48>}, {pipeline_mode = #tpu.pipeline_mode<synchronous>, transform_indices = @transform_1, window_bounds = array<i64: 48, 128>}, {pipeline_mode = #tpu.pipeline_mode<synchronous>, transform_indices = @transform_2, window_bounds = array<i64: 1, 128>}, {pipeline_mode = #tpu.pipeline_mode<synchronous>, transform_indices = @transform_3, window_bounds = array<i64: 128, 128>}, {pipeline_mode = #tpu.pipeline_mode<synchronous>, transform_indices = @transform_4, window_bounds = array<i64: 1, 128>}, {pipeline_mode = #tpu.pipeline_mode<synchronous>, transform_indices = @transform_5, window_bounds = array<i64: 128, 128>}, {pipeline_mode = #tpu.pipeline_mode<synchronous>, transform_indices = @transform_6, window_bounds = array<i64: 1, 128>}, {pipeline_mode = #tpu.pipeline_mode<synchronous>, transform_indices = @transform_7, window_bounds = array<i64: 128, 128>}, {pipeline_mode = #tpu.pipeline_mode<synchronous>, transform_indices = @transform_8, window_bounds = array<i64: 1, 128>}, {transform_indices = @transform_9, window_bounds = array<i64: 8, 128>}]} {
    %c0 = arith.constant 0 : index
    %c0_0 = arith.constant 0 : index
    %0 = vector.load %arg1[%c0, %c0_0] : memref<8x48xbf16, #tpu.memory_space<vmem>>, vector<8x48xbf16>
    %c0_1 = arith.constant 0 : index
    %c0_2 = arith.constant 0 : index
    %1 = vector.load %arg2[%c0_1, %c0_2] : memref<48x128xbf16, #tpu.memory_space<vmem>>, vector<48x128xbf16>
    %cst = arith.constant dense<0.000000e+00> : vector<8x128xf32>
    %2 = tpu.matmul %0, %1, %cst {dimension_numbers = #tpu.dot_dimension_numbers<[1], [0], [0], [1], [0, 0, 1, 1], [], []>} : vector<8x48xbf16>, vector<48x128xbf16>, vector<8x128xf32> -> vector<8x128xf32>
    %c0_3 = arith.constant 0 : index
    %c0_4 = arith.constant 0 : index
    %3 = vector.load %arg3[%c0_3, %c0_4] : memref<1x128xf32, #tpu.memory_space<vmem>>, vector<1x128xf32>
    %4 = vector.broadcast %3 : vector<1x128xf32> to vector<8x128xf32>
    %5 = arith.addf %2, %4 : vector<8x128xf32>
    %cst_5 = arith.constant 0.000000e+00 : f32
    %6 = vector.broadcast %cst_5 : f32 to vector<8x128xf32>
    %7 = arith.maximumf %5, %6 : vector<8x128xf32>
    %8 = arith.truncf %7 : vector<8x128xf32> to vector<8x128xbf16>
    %c0_6 = arith.constant 0 : index
    %c0_7 = arith.constant 0 : index
    %9 = vector.load %arg4[%c0_6, %c0_7] : memref<128x128xbf16, #tpu.memory_space<vmem>>, vector<128x128xbf16>
    %cst_8 = arith.constant dense<0.000000e+00> : vector<8x128xf32>
    %10 = tpu.matmul %8, %9, %cst_8 {dimension_numbers = #tpu.dot_dimension_numbers<[1], [0], [0], [1], [0, 0, 1, 1], [], []>} : vector<8x128xbf16>, vector<128x128xbf16>, vector<8x128xf32> -> vector<8x128xf32>
    %c0_9 = arith.constant 0 : index
    %c0_10 = arith.constant 0 : index
    %11 = vector.load %arg5[%c0_9, %c0_10] : memref<1x128xf32, #tpu.memory_space<vmem>>, vector<1x128xf32>
    %12 = vector.broadcast %11 : vector<1x128xf32> to vector<8x128xf32>
    %13 = arith.addf %10, %12 : vector<8x128xf32>
    %cst_11 = arith.constant 0.000000e+00 : f32
    %14 = vector.broadcast %cst_11 : f32 to vector<8x128xf32>
    %15 = arith.maximumf %13, %14 : vector<8x128xf32>
    %16 = arith.truncf %15 : vector<8x128xf32> to vector<8x128xbf16>
    %c0_12 = arith.constant 0 : index
    %c0_13 = arith.constant 0 : index
    %17 = vector.load %arg6[%c0_12, %c0_13] : memref<128x128xbf16, #tpu.memory_space<vmem>>, vector<128x128xbf16>
    %cst_14 = arith.constant dense<0.000000e+00> : vector<8x128xf32>
    %18 = tpu.matmul %16, %17, %cst_14 {dimension_numbers = #tpu.dot_dimension_numbers<[1], [0], [0], [1], [0, 0, 1, 1], [], []>} : vector<8x128xbf16>, vector<128x128xbf16>, vector<8x128xf32> -> vector<8x128xf32>
    %c0_15 = arith.constant 0 : index
    %c0_16 = arith.constant 0 : index
    %19 = vector.load %arg7[%c0_15, %c0_16] : memref<1x128xf32, #tpu.memory_space<vmem>>, vector<1x128xf32>
    %20 = vector.broadcast %19 : vector<1x128xf32> to vector<8x128xf32>
    %21 = arith.addf %18, %20 : vector<8x128xf32>
    %cst_17 = arith.constant 0.000000e+00 : f32
    %22 = vector.broadcast %cst_17 : f32 to vector<8x128xf32>
    %23 = arith.maximumf %21, %22 : vector<8x128xf32>
    %24 = arith.truncf %23 : vector<8x128xf32> to vector<8x128xbf16>
    %c0_18 = arith.constant 0 : index
    %c0_19 = arith.constant 0 : index
    %25 = vector.load %arg8[%c0_18, %c0_19] : memref<128x128xbf16, #tpu.memory_space<vmem>>, vector<128x128xbf16>
    %cst_20 = arith.constant dense<0.000000e+00> : vector<8x128xf32>
    %26 = tpu.matmul %24, %25, %cst_20 {dimension_numbers = #tpu.dot_dimension_numbers<[1], [0], [0], [1], [0, 0, 1, 1], [], []>} : vector<8x128xbf16>, vector<128x128xbf16>, vector<8x128xf32> -> vector<8x128xf32>
    %c0_21 = arith.constant 0 : index
    %c0_22 = arith.constant 0 : index
    %27 = vector.load %arg9[%c0_21, %c0_22] : memref<1x128xf32, #tpu.memory_space<vmem>>, vector<1x128xf32>
    %28 = vector.broadcast %27 : vector<1x128xf32> to vector<8x128xf32>
    %29 = arith.addf %26, %28 : vector<8x128xf32>
    %cst_23 = arith.constant -5.000000e+00 : f32
    %cst_24 = arith.constant 5.000000e+00 : f32
    %30 = vector.broadcast %cst_23 : f32 to vector<8x128xf32>
    %31 = arith.maximumf %30, %29 : vector<8x128xf32>
    %32 = vector.broadcast %cst_24 : f32 to vector<8x128xf32>
    %33 = arith.minimumf %32, %31 : vector<8x128xf32>
    %c0_25 = arith.constant 0 : index
    %c0_26 = arith.constant 0 : index
    %34 = vector.load %arg10[%c0_25, %c0_26] : memref<8x128xf32, #tpu.memory_space<vmem>>, vector<8x128xf32>
    tpu.vector_store %arg10[%c0_25, %c0_26], %33 {strides = array<i32>} : memref<8x128xf32, #tpu.memory_space<vmem>>, vector<8x128xf32>,
    return
  }
  func.func @transform_0(%arg0: i32) -> (i32, i32) {
    %c0_i32 = arith.constant 0 : i32
    %c0_i32_0 = arith.constant 0 : i32
    return %arg0, %c0_i32 : i32, i32
  }
  func.func @transform_1(%arg0: i32) -> (i32, i32) {
    %c0_i32 = arith.constant 0 : i32
    %c0_i32_0 = arith.constant 0 : i32
    %c0_i32_1 = arith.constant 0 : i32
    return %c0_i32, %c0_i32_0 : i32, i32
  }
  func.func @transform_2(%arg0: i32) -> (i32, i32) {
    %c0_i32 = arith.constant 0 : i32
    %c0_i32_0 = arith.constant 0 : i32
    %c0_i32_1 = arith.constant 0 : i32
    return %c0_i32, %c0_i32_0 : i32, i32
  }
  func.func @transform_3(%arg0: i32) -> (i32, i32) {
    %c0_i32 = arith.constant 0 : i32
    %c0_i32_0 = arith.constant 0 : i32
    %c0_i32_1 = arith.constant 0 : i32
    return %c0_i32, %c0_i32_0 : i32, i32
  }
  func.func @transform_4(%arg0: i32) -> (i32, i32) {
    %c0_i32 = arith.constant 0 : i32
    %c0_i32_0 = arith.constant 0 : i32
    %c0_i32_1 = arith.constant 0 : i32
    return %c0_i32, %c0_i32_0 : i32, i32
  }
  func.func @transform_5(%arg0: i32) -> (i32, i32) {
    %c0_i32 = arith.constant 0 : i32
    %c0_i32_0 = arith.constant 0 : i32
    %c0_i32_1 = arith.constant 0 : i32
    return %c0_i32, %c0_i32_0 : i32, i32
  }
  func.func @transform_6(%arg0: i32) -> (i32, i32) {
    %c0_i32 = arith.constant 0 : i32
    %c0_i32_0 = arith.constant 0 : i32
    %c0_i32_1 = arith.constant 0 : i32
    return %c0_i32, %c0_i32_0 : i32, i32
  }
  func.func @transform_7(%arg0: i32) -> (i32, i32) {
    %c0_i32 = arith.constant 0 : i32
    %c0_i32_0 = arith.constant 0 : i32
    %c0_i32_1 = arith.constant 0 : i32
    return %c0_i32, %c0_i32_0 : i32, i32
  }
  func.func @transform_8(%arg0: i32) -> (i32, i32) {
    %c0_i32 = arith.constant 0 : i32
    %c0_i32_0 = arith.constant 0 : i32
    %c0_i32_1 = arith.constant 0 : i32
    return %c0_i32, %c0_i32_0 : i32, i32
  }
  func.func @transform_9(%arg0: i32) -> (i32, i32) {
    %c0_i32 = arith.constant 0 : i32
    %c0_i32_0 = arith.constant 0 : i32
    return %arg0, %c0_i32 : i32, i32
  }
}

</mosaic_0001>

<llo_original>
// kernel: tpu_custom_call.1
$region0: #{tpu_custom_call.1}
  #allocation0 [shape = 'u32[]', space=smem, size = 0x4, offset = 0x4, fixed_abs, tag = 'smem constant byte address 0x4 - core index']
  #allocation1 [shape = 'u32[144,128]{1,0:T(1,128)}', space=vmem, size = 0x12000, scoped, tag = 'internal scratch']
  %s0 = inlined_call_operand.hbm [shape: bf16[8,48], index: 0, kind: input, shape index: {}]
  %s1 = inlined_call_operand.hbm [shape: bf16[48,128], index: 1, kind: input, shape index: {}]
  %s2 = inlined_call_operand.vmem [shape: f32[1,128], index: 2, kind: input, shape index: {}]
  %s3 = inlined_call_operand.hbm [shape: bf16[128,128], index: 3, kind: input, shape index: {}]
  %s4 = inlined_call_operand.vmem [shape: f32[1,128], index: 4, kind: input, shape index: {}]
  %s5 = inlined_call_operand.hbm [shape: bf16[128,128], index: 5, kind: input, shape index: {}]
  %s6 = inlined_call_operand.vmem [shape: f32[1,128], index: 6, kind: input, shape index: {}]
  %s7 = inlined_call_operand.hbm [shape: bf16[128,128], index: 7, kind: input, shape index: {}]
  %s8 = inlined_call_operand.vmem [shape: f32[1,128], index: 8, kind: input, shape index: {}]
  %s9 = inlined_call_operand.hbm [shape: f32[8,128], index: 9, kind: output, shape index: {}]
  %s10 = sld [smem:[#allocation0]]
  $region66: #{tpu_custom_call.1} parent=0
    _
  %s12 = ssub.s32 1, %s10
  %s13 = scalar_select 0, %s12, %s10
  $region1: #{tpu_custom_call.1} parent=0
    #allocation2 [shape = 'u8[2048]{0}', space=vmem, size = 0x800, scoped, tag = 'input window, operand 0, single buffered']
    #allocation3 [shape = 's32[1]{0}', space=sflag, size = 0x4, scoped, tag = 'scoped memory for tpu_custom_call.1']
    #allocation4 [shape = 's32[1]{0}', space=sflag, size = 0x4, scoped, tag = 'scoped memory for tpu_custom_call.1']
    #allocation5 [shape = 'u8[12288]{0}', space=vmem, size = 0x3000, scoped, tag = 'input window, operand 1, single buffered']
    #allocation6 [shape = 's32[1]{0}', space=sflag, size = 0x4, scoped, tag = 'scoped memory for tpu_custom_call.1']
    #allocation7 [shape = 'u8[32768]{0}', space=vmem, size = 0x8000, scoped, tag = 'input window, operand 3, single buffered']
    #allocation8 [shape = 'u8[32768]{0}', space=vmem, size = 0x8000, scoped, tag = 'input window, operand 5, single buffered']
    #allocation9 [shape = 's32[1]{0}', space=sflag, size = 0x4, scoped, tag = 'scoped memory for tpu_custom_call.1']
    #allocation10 [shape = 'u8[32768]{0}', space=vmem, size = 0x8000, scoped, tag = 'input window, operand 7, single buffered']
    #allocation11 [shape = 'u8[4096]{0}', space=vmem, size = 0x1000, scoped, tag = 'output window, operand 0, single buffered']
    %14 = vsyncpa [#allocation3], 0
    %15 = vsyncpa [#allocation6], 0
    %16 = vsyncpa [#allocation9], 0
    %17 = vsyncpa [#allocation4], 0
    // Predicated region
    $region2: #{tpu_custom_call.1} parent=1 // pred_check
      _
    $region3: #{tpu_custom_call.1} parent=1 // pred_check_branch
      %19 = sbr.rel (0) target = $region5
    $region4: #{tpu_custom_call.1} parent=1 // pred_region
      %s21 = ssub.s32 64, 64
      %22 = vsyncadd [#allocation3], %s21
      %s24 = sshll.u32 [#allocation2], 4
      %s25 = int_to_ptr.vmem [resolvable:$true] %s24
      %27 = dma.hbm_to_vmem [thread:$0]  %s0, 64, %s25, [#allocation3]
    $region5: #{tpu_custom_call.1} parent=1 // pred_fallthru
      _
    // Predicated region
    $region6: #{tpu_custom_call.1} parent=1 // pred_check
      _
    $region7: #{tpu_custom_call.1} parent=1 // pred_check_branch
      %29 = sbr.rel (0) target = $region9
    $region8: #{tpu_custom_call.1} parent=1 // pred_region
      %s31 = ssub.s32 384, 384
      %32 = vsyncadd [#allocation6], %s31
      %s33 = sshll.u32 [#allocation5], 4
      %s34 = int_to_ptr.vmem [resolvable:$true] %s33
      %39 = dma.hbm_to_vmem [thread:$0]  %s1, 384, %s34, [#allocation6], 64, 64, 4
    $region9: #{tpu_custom_call.1} parent=1 // pred_fallthru
      _
    // Predicated region
    $region10: #{tpu_custom_call.1} parent=1 // pred_check
      _
    $region11: #{tpu_custom_call.1} parent=1 // pred_check_branch
      %41 = sbr.rel (0) target = $region13
    $region12: #{tpu_custom_call.1} parent=1 // pred_region
      _
    $region13: #{tpu_custom_call.1} parent=1 // pred_fallthru
      _
    // Predicated region
    $region14: #{tpu_custom_call.1} parent=1 // pred_check
      _
    $region15: #{tpu_custom_call.1} parent=1 // pred_check_branch
      %43 = sbr.rel (0) target = $region17
    $region16: #{tpu_custom_call.1} parent=1 // pred_region
      %s45 = ssub.s32 1024, 1024
      %46 = vsyncadd [#allocation6], %s45
      %s47 = sshll.u32 [#allocation7], 4
      %s48 = int_to_ptr.vmem [resolvable:$true] %s47
      %53 = dma.hbm_to_vmem [thread:$0]  %s3, 1024, %s48, [#allocation6], 64, 64, 4
    $region17: #{tpu_custom_call.1} parent=1 // pred_fallthru
      _
    // Predicated region
    $region18: #{tpu_custom_call.1} parent=1 // pred_check
      _
    $region19: #{tpu_custom_call.1} parent=1 // pred_check_branch
      %55 = sbr.rel (0) target = $region21
    $region20: #{tpu_custom_call.1} parent=1 // pred_region
      _
    $region21: #{tpu_custom_call.1} parent=1 // pred_fallthru
      _
    // Predicated region
    $region22: #{tpu_custom_call.1} parent=1 // pred_check
      _
    $region23: #{tpu_custom_call.1} parent=1 // pred_check_branch
      %57 = sbr.rel (0) target = $region25
    $region24: #{tpu_custom_call.1} parent=1 // pred_region
      %s59 = ssub.s32 1024, 1024
      %60 = vsyncadd [#allocation9], %s59
      %s61 = sshll.u32 [#allocation8], 4
      %s62 = int_to_ptr.vmem [resolvable:$true] %s61
      %67 = dma.hbm_to_vmem [thread:$0]  %s5, 1024, %s62, [#allocation9], 64, 64, 4
    $region25: #{tpu_custom_call.1} parent=1 // pred_fallthru
      _
    // Predicated region
    $region26: #{tpu_custom_call.1} parent=1 // pred_check
      _
    $region27: #{tpu_custom_call.1} parent=1 // pred_check_branch
      %69 = sbr.rel (0) target = $region29
    $region28: #{tpu_custom_call.1} parent=1 // pred_region
      _
    $region29: #{tpu_custom_call.1} parent=1 // pred_fallthru
      _
    // Predicated region
    $region30: #{tpu_custom_call.1} parent=1 // pred_check
      _
    $region31: #{tpu_custom_call.1} parent=1 // pred_check_branch
      %71 = sbr.rel (0) target = $region33
    $region32: #{tpu_custom_call.1} parent=1 // pred_region
      %s73 = ssub.s32 1024, 1024
      %74 = vsyncadd [#allocation9], %s73
      %s75 = sshll.u32 [#allocation10], 4
      %s76 = int_to_ptr.vmem [resolvable:$true] %s75
      %81 = dma.hbm_to_vmem [thread:$0]  %s7, 1024, %s76, [#allocation9], 64, 64, 4
    $region33: #{tpu_custom_call.1} parent=1 // pred_fallthru
      _
    // Predicated region
    $region34: #{tpu_custom_call.1} parent=1 // pred_check
      _
    $region35: #{tpu_custom_call.1} parent=1 // pred_check_branch
      %83 = sbr.rel (0) target = $region37
    $region36: #{tpu_custom_call.1} parent=1 // pred_region
      _
    $region37: #{tpu_custom_call.1} parent=1 // pred_fallthru
      _
    // Predicated region
    $region38: #{tpu_custom_call.1} parent=1 // pred_check
      _
    $region39: #{tpu_custom_call.1} parent=1 // pred_check_branch
      %85 = sbr.rel (0) target = $region41
    $region40: #{tpu_custom_call.1} parent=1 // pred_region
      %86 = dma.done [#allocation3], 64
    $region41: #{tpu_custom_call.1} parent=1 // pred_fallthru
      _
    // Predicated region
    $region42: #{tpu_custom_call.1} parent=1 // pred_check
      _
    $region43: #{tpu_custom_call.1} parent=1 // pred_check_branch
      %88 = sbr.rel (0) target = $region45
    $region44: #{tpu_custom_call.1} parent=1 // pred_region
      %89 = dma.done [#allocation6], 384
    $region45: #{tpu_custom_call.1} parent=1 // pred_fallthru
      _
    // Predicated region
    $region46: #{tpu_custom_call.1} parent=1 // pred_check
      _
    $region47: #{tpu_custom_call.1} parent=1 // pred_check_branch
      %91 = sbr.rel (0) target = $region49
    $region48: #{tpu_custom_call.1} parent=1 // pred_region
      %92 = dma.done [#allocation6], 1024
    $region49: #{tpu_custom_call.1} parent=1 // pred_fallthru
      _
    // Predicated region
    $region50: #{tpu_custom_call.1} parent=1 // pred_check
      _
    $region51: #{tpu_custom_call.1} parent=1 // pred_check_branch
      %94 = sbr.rel (0) target = $region53
    $region52: #{tpu_custom_call.1} parent=1 // pred_region
      %95 = dma.done [#allocation9], 1024
    $region53: #{tpu_custom_call.1} parent=1 // pred_fallthru
      _
    // Predicated region
    $region54: #{tpu_custom_call.1} parent=1 // pred_check
      _
    $region55: #{tpu_custom_call.1} parent=1 // pred_check_branch
      %97 = sbr.rel (0) target = $region57
    $region56: #{tpu_custom_call.1} parent=1 // pred_region
      %98 = dma.done [#allocation9], 1024
    $region57: #{tpu_custom_call.1} parent=1 // pred_fallthru
      _
    %v100 = vld [vmem:[#allocation2] sm:$0xf]
    %v101 = vld [vmem:[#allocation5] sm:$0xf]
    %v102 = vld [vmem:[#allocation5 + $0x4] sm:$0xf]
    %v103 = vld [vmem:[#allocation5 + $0x8] sm:$0xf]
    %v104 = vld [vmem:[#allocation5 + $0xc] sm:$0xf]
    %v105 = vld [vmem:[#allocation5 + $0x10] sm:$0xf]
    %v106 = vld [vmem:[#allocation5 + $0x14] sm:$0xf]
    %v107 = vld [vmem:[%s2] sm:$0x1]
    %v109 = vlaneseq
    %v110 = vshrl.u32 %v109, 7
    %v111 = vsub.s32 0, %v110
    %v112 = vrot.slane %v107, %v111
    %v120 = vunpack.c.l.b16 %v101
    %v121 = vunpack.c.l.b16 %v102
    %v122 = vunpack.c.l.b16 %v103
    %v123 = vunpack.c.l.b16 %v104
    %v124 = vunpack.c.l.b16 %v105
    %v125 = vunpack.c.l.b16 %v106
    %v126 = vpack.c.b16 %v121, %v120
    %v127 = vpack.c.b16 %v123, %v122
    %v128 = vpack.c.b16 %v125, %v124
    %vm132 = vcmask 392192
    %v134 = vsel %vm132, %v100, 0
    %136 = vmatprep.subr.bf16.mxu0 0
    %137 = vmatpush1.bf16.msra.mxu0 %v126
    %138 = vmatprep.subr.bf16.mxu0 0
    %139 = vmatpush1.bf16.msra.mxu0 %v127
    %140 = vmatprep.subr.bf16.mxu0 0
    %141 = vmatpush1.bf16.msra.mxu0 %v128
    %142 = vmatprep.subr.bf16.mxu0 0
    %143 = vmatpush1.bf16.msra.mxu0 0
    %144 = vmatprep.subr.bf16.mxu0 0
    %145 = vmatpush1.bf16.msra.mxu0 0
    %146 = vmatprep.subr.bf16.mxu0 0
    %147 = vmatpush1.bf16.msra.mxu0 0
    %148 = vmatprep.subr.bf16.mxu0 0
    %149 = vmatpush1.bf16.msra.mxu0 0
    %150 = vmatprep.subr.bf16.mxu0 0
    %151 = vmatpush1.bf16.msra.mxu0 0
    %152 = vmatprep.subr.bf16.mxu0 0
    %153 = vmatpush1.bf16.msra.mxu0 0
    %154 = vmatprep.subr.bf16.mxu0 0
    %155 = vmatpush1.bf16.msra.mxu0 0
    %156 = vmatprep.subr.bf16.mxu0 0
    %157 = vmatpush1.bf16.msra.mxu0 0
    %158 = vmatprep.subr.bf16.mxu0 0
    %159 = vmatpush1.bf16.msra.mxu0 0
    %160 = vmatprep.subr.bf16.mxu0 0
    %161 = vmatpush1.bf16.msra.mxu0 0
    %162 = vmatprep.subr.bf16.mxu0 0
    %163 = vmatpush1.bf16.msra.mxu0 0
    %164 = vmatprep.subr.bf16.mxu0 0
    %165 = vmatpush1.bf16.msra.mxu0 0
    %166 = vmatprep.subr.bf16.mxu0 0
    %167 = vmatpush1.bf16.msra.mxu0 0
    %168 = vmatprep.mubr.bf16.mxu0 0
    %169 = vmatmul.mubr.bf16.gmra.mrb[0].mxu0 %v134
    %v170 = vpop.f32.mrb[0].mxu0
    %v171 = vadd.f32 %v112, %v170
    %v172 = vpop.f32.mrb[0].mxu0
    %v173 = vpop.f32.mrb[0].mxu0
    %v174 = vpop.f32.mrb[0].mxu0
    %175 = vdwg.mxu0
    %v176 = vmax.f32 %v171, 0.0
    %v177 = vpack.c.bf16 %v176, %v176
    %v178 = vld [vmem:[#allocation7] sm:$0xf]
    %v179 = vld [vmem:[#allocation7 + $0x4] sm:$0xf]
    %v180 = vld [vmem:[#allocation7 + $0x8] sm:$0xf]
    %v181 = vld [vmem:[#allocation7 + $0xc] sm:$0xf]
    %v182 = vld [vmem:[#allocation7 + $0x10] sm:$0xf]
    %v183 = vld [vmem:[#allocation7 + $0x14] sm:$0xf]
    %v184 = vld [vmem:[#allocation7 + $0x18] sm:$0xf]
    %v185 = vld [vmem:[#allocation7 + $0x1c] sm:$0xf]
    %v186 = vld [vmem:[#allocation7 + $0x20] sm:$0xf]
    %v187 = vld [vmem:[#allocation7 + $0x24] sm:$0xf]
    %v188 = vld [vmem:[#allocation7 + $0x28] sm:$0xf]
    %v189 = vld [vmem:[#allocation7 + $0x2c] sm:$0xf]
    %v190 = vld [vmem:[#allocation7 + $0x30] sm:$0xf]
    %v191 = vld [vmem:[#allocation7 + $0x34] sm:$0xf]
    %v192 = vld [vmem:[#allocation7 + $0x38] sm:$0xf]
    %v193 = vld [vmem:[#allocation7 + $0x3c] sm:$0xf]
    %v194 = vld [vmem:[%s4] sm:$0x1]
    %v196 = vlaneseq
    %v197 = vshrl.u32 %v196, 7
    %v198 = vsub.s32 0, %v197
    %v199 = vrot.slane %v194, %v198
    %v217 = vunpack.c.l.b16 %v178
    %v218 = vunpack.c.l.b16 %v179
    %v219 = vunpack.c.l.b16 %v180
    %v220 = vunpack.c.l.b16 %v181
    %v221 = vunpack.c.l.b16 %v182
    %v222 = vunpack.c.l.b16 %v183
    %v223 = vunpack.c.l.b16 %v184
    %v224 = vunpack.c.l.b16 %v185
    %v225 = vunpack.c.l.b16 %v186
    %v226 = vunpack.c.l.b16 %v187
    %v227 = vunpack.c.l.b16 %v188
    %v228 = vunpack.c.l.b16 %v189
    %v229 = vunpack.c.l.b16 %v190
    %v230 = vunpack.c.l.b16 %v191
    %v231 = vunpack.c.l.b16 %v192
    %v232 = vunpack.c.l.b16 %v193
    %v233 = vpack.c.b16 %v218, %v217
    %v234 = vpack.c.b16 %v220, %v219
    %v235 = vpack.c.b16 %v222, %v221
    %v236 = vpack.c.b16 %v224, %v223
    %v237 = vpack.c.b16 %v226, %v225
    %v238 = vpack.c.b16 %v228, %v227
    %v239 = vpack.c.b16 %v230, %v229
    %v240 = vpack.c.b16 %v232, %v231
    %249 = vmatprep.subr.bf16.mxu0 0
    %250 = vmatpush1.bf16.msra.mxu0 %v233
    %251 = vmatprep.subr.bf16.mxu0 0
    %252 = vmatpush1.bf16.msra.mxu0 %v234
    %253 = vmatprep.subr.bf16.mxu0 0
    %254 = vmatpush1.bf16.msra.mxu0 %v235
    %255 = vmatprep.subr.bf16.mxu0 0
    %256 = vmatpush1.bf16.msra.mxu0 %v236
    %257 = vmatprep.subr.bf16.mxu0 0
    %258 = vmatpush1.bf16.msra.mxu0 %v237
    %259 = vmatprep.subr.bf16.mxu0 0
    %260 = vmatpush1.bf16.msra.mxu0 %v238
    %261 = vmatprep.subr.bf16.mxu0 0
    %262 = vmatpush1.bf16.msra.mxu0 %v239
    %263 = vmatprep.subr.bf16.mxu0 0
    %264 = vmatpush1.bf16.msra.mxu0 %v240
    %265 = vmatprep.subr.bf16.mxu0 0
    %266 = vmatpush1.bf16.msra.mxu0 0
    %267 = vmatprep.subr.bf16.mxu0 0
    %268 = vmatpush1.bf16.msra.mxu0 0
    %269 = vmatprep.subr.bf16.mxu0 0
    %270 = vmatpush1.bf16.msra.mxu0 0
    %271 = vmatprep.subr.bf16.mxu0 0
    %272 = vmatpush1.bf16.msra.mxu0 0
    %273 = vmatprep.subr.bf16.mxu0 0
    %274 = vmatpush1.bf16.msra.mxu0 0
    %275 = vmatprep.subr.bf16.mxu0 0
    %276 = vmatpush1.bf16.msra.mxu0 0
    %277 = vmatprep.subr.bf16.mxu0 0
    %278 = vmatpush1.bf16.msra.mxu0 0
    %279 = vmatprep.subr.bf16.mxu0 0
    %280 = vmatpush1.bf16.msra.mxu0 0
    %281 = vmatprep.mubr.bf16.mxu0 0
    %282 = vmatmul.mubr.bf16.gmra.mrb[0].mxu0 %v177
    %v283 = vpop.f32.mrb[0].mxu0
    %v284 = vadd.f32 %v199, %v283
    %v285 = vpop.f32.mrb[0].mxu0
    %v286 = vpop.f32.mrb[0].mxu0
    %v287 = vpop.f32.mrb[0].mxu0
    %288 = vdwg.mxu0
    %v289 = vmax.f32 %v284, 0.0
    %v290 = vpack.c.bf16 %v289, %v289
    %v291 = vld [vmem:[#allocation8] sm:$0xf]
    %v292 = vld [vmem:[#allocation8 + $0x4] sm:$0xf]
    %v293 = vld [vmem:[#allocation8 + $0x8] sm:$0xf]
    %v294 = vld [vmem:[#allocation8 + $0xc] sm:$0xf]
    %v295 = vld [vmem:[#allocation8 + $0x10] sm:$0xf]
    %v296 = vld [vmem:[#allocation8 + $0x14] sm:$0xf]
    %v297 = vld [vmem:[#allocation8 + $0x18] sm:$0xf]
    %v298 = vld [vmem:[#allocation8 + $0x1c] sm:$0xf]
    %v299 = vld [vmem:[#allocation8 + $0x20] sm:$0xf]
    %v300 = vld [vmem:[#allocation8 + $0x24] sm:$0xf]
    %v301 = vld [vmem:[#allocation8 + $0x28] sm:$0xf]
    %v302 = vld [vmem:[#allocation8 + $0x2c] sm:$0xf]
    %v303 = vld [vmem:[#allocation8 + $0x30] sm:$0xf]
    %v304 = vld [vmem:[#allocation8 + $0x34] sm:$0xf]
    %v305 = vld [vmem:[#allocation8 + $0x38] sm:$0xf]
    %v306 = vld [vmem:[#allocation8 + $0x3c] sm:$0xf]
    %v307 = vld [vmem:[%s6] sm:$0x1]
    %v309 = vlaneseq
    %v310 = vshrl.u32 %v309, 7
    %v311 = vsub.s32 0, %v310
    %v312 = vrot.slane %v307, %v311
    %v330 = vunpack.c.l.b16 %v291
    %v331 = vunpack.c.l.b16 %v292
    %v332 = vunpack.c.l.b16 %v293
    %v333 = vunpack.c.l.b16 %v294
    %v334 = vunpack.c.l.b16 %v295
    %v335 = vunpack.c.l.b16 %v296
    %v336 = vunpack.c.l.b16 %v297
    %v337 = vunpack.c.l.b16 %v298
    %v338 = vunpack.c.l.b16 %v299
    %v339 = vunpack.c.l.b16 %v300
    %v340 = vunpack.c.l.b16 %v301
    %v341 = vunpack.c.l.b16 %v302
    %v342 = vunpack.c.l.b16 %v303
    %v343 = vunpack.c.l.b16 %v304
    %v344 = vunpack.c.l.b16 %v305
    %v345 = vunpack.c.l.b16 %v306
    %v346 = vpack.c.b16 %v331, %v330
    %v347 = vpack.c.b16 %v333, %v332
    %v348 = vpack.c.b16 %v335, %v334
    %v349 = vpack.c.b16 %v337, %v336
    %v350 = vpack.c.b16 %v339, %v338
    %v351 = vpack.c.b16 %v341, %v340
    %v352 = vpack.c.b16 %v343, %v342
    %v353 = vpack.c.b16 %v345, %v344
    %362 = vmatprep.subr.bf16.mxu0 0
    %363 = vmatpush1.bf16.msra.mxu0 %v346
    %364 = vmatprep.subr.bf16.mxu0 0
    %365 = vmatpush1.bf16.msra.mxu0 %v347
    %366 = vmatprep.subr.bf16.mxu0 0
    %367 = vmatpush1.bf16.msra.mxu0 %v348
    %368 = vmatprep.subr.bf16.mxu0 0
    %369 = vmatpush1.bf16.msra.mxu0 %v349
    %370 = vmatprep.subr.bf16.mxu0 0
    %371 = vmatpush1.bf16.msra.mxu0 %v350
    %372 = vmatprep.subr.bf16.mxu0 0
    %373 = vmatpush1.bf16.msra.mxu0 %v351
    %374 = vmatprep.subr.bf16.mxu0 0
    %375 = vmatpush1.bf16.msra.mxu0 %v352
    %376 = vmatprep.subr.bf16.mxu0 0
    %377 = vmatpush1.bf16.msra.mxu0 %v353
    %378 = vmatprep.subr.bf16.mxu0 0
    %379 = vmatpush1.bf16.msra.mxu0 0
    %380 = vmatprep.subr.bf16.mxu0 0
    %381 = vmatpush1.bf16.msra.mxu0 0
    %382 = vmatprep.subr.bf16.mxu0 0
    %383 = vmatpush1.bf16.msra.mxu0 0
    %384 = vmatprep.subr.bf16.mxu0 0
    %385 = vmatpush1.bf16.msra.mxu0 0
    %386 = vmatprep.subr.bf16.mxu0 0
    %387 = vmatpush1.bf16.msra.mxu0 0
    %388 = vmatprep.subr.bf16.mxu0 0
    %389 = vmatpush1.bf16.msra.mxu0 0
    %390 = vmatprep.subr.bf16.mxu0 0
    %391 = vmatpush1.bf16.msra.mxu0 0
    %392 = vmatprep.subr.bf16.mxu0 0
    %393 = vmatpush1.bf16.msra.mxu0 0
    %394 = vmatprep.mubr.bf16.mxu0 0
    %395 = vmatmul.mubr.bf16.gmra.mrb[0].mxu0 %v290
    %v396 = vpop.f32.mrb[0].mxu0
    %v397 = vadd.f32 %v312, %v396
    %v398 = vpop.f32.mrb[0].mxu0
    %v399 = vpop.f32.mrb[0].mxu0
    %v400 = vpop.f32.mrb[0].mxu0
    %401 = vdwg.mxu0
    %v402 = vmax.f32 %v397, 0.0
    %v403 = vpack.c.bf16 %v402, %v402
    %v404 = vld [vmem:[#allocation10] sm:$0xf]
    %v405 = vld [vmem:[#allocation10 + $0x4] sm:$0xf]
    %v406 = vld [vmem:[#allocation10 + $0x8] sm:$0xf]
    %v407 = vld [vmem:[#allocation10 + $0xc] sm:$0xf]
    %v408 = vld [vmem:[#allocation10 + $0x10] sm:$0xf]
    %v409 = vld [vmem:[#allocation10 + $0x14] sm:$0xf]
    %v410 = vld [vmem:[#allocation10 + $0x18] sm:$0xf]
    %v411 = vld [vmem:[#allocation10 + $0x1c] sm:$0xf]
    %v412 = vld [vmem:[#allocation10 + $0x20] sm:$0xf]
    %v413 = vld [vmem:[#allocation10 + $0x24] sm:$0xf]
    %v414 = vld [vmem:[#allocation10 + $0x28] sm:$0xf]
    %v415 = vld [vmem:[#allocation10 + $0x2c] sm:$0xf]
    %v416 = vld [vmem:[#allocation10 + $0x30] sm:$0xf]
    %v417 = vld [vmem:[#allocation10 + $0x34] sm:$0xf]
    %v418 = vld [vmem:[#allocation10 + $0x38] sm:$0xf]
    %v419 = vld [vmem:[#allocation10 + $0x3c] sm:$0xf]
    %v420 = vld [vmem:[%s8] sm:$0x1]
    %v422 = vlaneseq
    %v423 = vshrl.u32 %v422, 7
    %v424 = vsub.s32 0, %v423
    %v425 = vrot.slane %v420, %v424
    %v443 = vunpack.c.l.b16 %v404
    %v444 = vunpack.c.l.b16 %v405
    %v445 = vunpack.c.l.b16 %v406
    %v446 = vunpack.c.l.b16 %v407
    %v447 = vunpack.c.l.b16 %v408
    %v448 = vunpack.c.l.b16 %v409
    %v449 = vunpack.c.l.b16 %v410
    %v450 = vunpack.c.l.b16 %v411
    %v451 = vunpack.c.l.b16 %v412
    %v452 = vunpack.c.l.b16 %v413
    %v453 = vunpack.c.l.b16 %v414
    %v454 = vunpack.c.l.b16 %v415
    %v455 = vunpack.c.l.b16 %v416
    %v456 = vunpack.c.l.b16 %v417
    %v457 = vunpack.c.l.b16 %v418
    %v458 = vunpack.c.l.b16 %v419
    %v459 = vpack.c.b16 %v444, %v443
    %v460 = vpack.c.b16 %v446, %v445
    %v461 = vpack.c.b16 %v448, %v447
    %v462 = vpack.c.b16 %v450, %v449
    %v463 = vpack.c.b16 %v452, %v451
    %v464 = vpack.c.b16 %v454, %v453
    %v465 = vpack.c.b16 %v456, %v455
    %v466 = vpack.c.b16 %v458, %v457
    %475 = vmatprep.subr.bf16.mxu0 0
    %476 = vmatpush1.bf16.msra.mxu0 %v459
    %477 = vmatprep.subr.bf16.mxu0 0
    %478 = vmatpush1.bf16.msra.mxu0 %v460
    %479 = vmatprep.subr.bf16.mxu0 0
    %480 = vmatpush1.bf16.msra.mxu0 %v461
    %481 = vmatprep.subr.bf16.mxu0 0
    %482 = vmatpush1.bf16.msra.mxu0 %v462
    %483 = vmatprep.subr.bf16.mxu0 0
    %484 = vmatpush1.bf16.msra.mxu0 %v463
    %485 = vmatprep.subr.bf16.mxu0 0
    %486 = vmatpush1.bf16.msra.mxu0 %v464
    %487 = vmatprep.subr.bf16.mxu0 0
    %488 = vmatpush1.bf16.msra.mxu0 %v465
    %489 = vmatprep.subr.bf16.mxu0 0
    %490 = vmatpush1.bf16.msra.mxu0 %v466
    %491 = vmatprep.subr.bf16.mxu0 0
    %492 = vmatpush1.bf16.msra.mxu0 0
    %493 = vmatprep.subr.bf16.mxu0 0
    %494 = vmatpush1.bf16.msra.mxu0 0
    %495 = vmatprep.subr.bf16.mxu0 0
    %496 = vmatpush1.bf16.msra.mxu0 0
    %497 = vmatprep.subr.bf16.mxu0 0
    %498 = vmatpush1.bf16.msra.mxu0 0
    %499 = vmatprep.subr.bf16.mxu0 0
    %500 = vmatpush1.bf16.msra.mxu0 0
    %501 = vmatprep.subr.bf16.mxu0 0
    %502 = vmatpush1.bf16.msra.mxu0 0
    %503 = vmatprep.subr.bf16.mxu0 0
    %504 = vmatpush1.bf16.msra.mxu0 0
    %505 = vmatprep.subr.bf16.mxu0 0
    %506 = vmatpush1.bf16.msra.mxu0 0
    %507 = vmatprep.mubr.bf16.mxu0 0
    %508 = vmatmul.mubr.bf16.gmra.mrb[0].mxu0 %v403
    %v509 = vpop.f32.mrb[0].mxu0
    %v510 = vadd.f32 %v425, %v509
    %v511 = vpop.f32.mrb[0].mxu0
    %v512 = vpop.f32.mrb[0].mxu0
    %v513 = vpop.f32.mrb[0].mxu0
    %514 = vdwg.mxu0
    %v515 = vmax.f32 %v510, -5.0
    %v516 = vmin.f32 %v515, 5.0
    %517 = vst [vmem:[#allocation11] sm:$0xff] %v516
    // Predicated region
    $region58: #{tpu_custom_call.1} parent=1 // pred_check
      _
    $region59: #{tpu_custom_call.1} parent=1 // pred_check_branch
      %519 = sbr.rel (0) target = $region61
    $region60: #{tpu_custom_call.1} parent=1 // pred_region
      %s521 = ssub.s32 128, 128
      %522 = vsyncadd [#allocation4], %s521
      %s524 = sshll.u32 [#allocation11], 4
      %s525 = int_to_ptr.vmem [resolvable:$true] %s524
      %527 = dma.vmem_to_hbm [thread:$0]  %s525, 128, %s9, [#allocation4]
    $region61: #{tpu_custom_call.1} parent=1 // pred_fallthru
      _
    // Predicated region
    $region62: #{tpu_custom_call.1} parent=1 // pred_check
      _
    $region63: #{tpu_custom_call.1} parent=1 // pred_check_branch
      %529 = sbr.rel (0) target = $region65
    $region64: #{tpu_custom_call.1} parent=1 // pred_region
      %530 = dma.done [#allocation4], 128
    $region65: #{tpu_custom_call.1} parent=1 // pred_fallthru
      _
    %531 = vsyncpa [#allocation3], 1
    %532 = vsyncpa [#allocation6], 1
    %533 = vsyncpa [#allocation9], 1
    %534 = vsyncpa [#allocation4], 1

// kernel: tpu_custom_call.1
$region0: #{tpu_custom_call.1}
  #allocation0 [shape = 'u32[]', space=smem, size = 0x4, offset = 0x4, fixed_abs, tag = 'smem constant byte address 0x4 - core index']
  #allocation1 [shape = 'u32[144,128]{1,0:T(1,128)}', space=vmem, size = 0x12000, scoped, tag = 'internal scratch']
  %s0 = inlined_call_operand.hbm [shape: bf16[8,48], index: 0, kind: input, shape index: {}]
  %s1 = inlined_call_operand.hbm [shape: bf16[48,128], index: 1, kind: input, shape index: {}]
  %s2 = inlined_call_operand.vmem [shape: f32[1,128], index: 2, kind: input, shape index: {}]
  %s3 = inlined_call_operand.hbm [shape: bf16[128,128], index: 3, kind: input, shape index: {}]
  %s4 = inlined_call_operand.vmem [shape: f32[1,128], index: 4, kind: input, shape index: {}]
  %s5 = inlined_call_operand.hbm [shape: bf16[128,128], index: 5, kind: input, shape index: {}]
  %s6 = inlined_call_operand.vmem [shape: f32[1,128], index: 6, kind: input, shape index: {}]
  %s7 = inlined_call_operand.hbm [shape: bf16[128,128], index: 7, kind: input, shape index: {}]
  %s8 = inlined_call_operand.vmem [shape: f32[1,128], index: 8, kind: input, shape index: {}]
  %s9 = inlined_call_operand.hbm [shape: f32[8,128], index: 9, kind: output, shape index: {}]
  %s10 = sld [smem:[#allocation0]]
  $region66: #{tpu_custom_call.1} parent=0
    _
  %s12 = ssub.s32 1, %s10
  %s13 = scalar_select 0, %s12, %s10
  $region1: #{tpu_custom_call.1} parent=0
    #allocation2 [shape = 'u8[2048]{0}', space=vmem, size = 0x800, scoped, tag = 'input window, operand 0, single buffered']
    #allocation3 [shape = 's32[1]{0}', space=sflag, size = 0x4, scoped, tag = 'scoped memory for tpu_custom_call.1']
    #allocation4 [shape = 's32[1]{0}', space=sflag, size = 0x4, scoped, tag = 'scoped memory for tpu_custom_call.1']
    #allocation5 [shape = 'u8[12288]{0}', space=vmem, size = 0x3000, scoped, tag = 'input window, operand 1, single buffered']
    #allocation6 [shape = 's32[1]{0}', space=sflag, size = 0x4, scoped, tag = 'scoped memory for tpu_custom_call.1']
    #allocation7 [shape = 'u8[32768]{0}', space=vmem, size = 0x8000, scoped, tag = 'input window, operand 3, single buffered']
    #allocation8 [shape = 'u8[32768]{0}', space=vmem, size = 0x8000, scoped, tag = 'input window, operand 5, single buffered']
    #allocation9 [shape = 's32[1]{0}', space=sflag, size = 0x4, scoped, tag = 'scoped memory for tpu_custom_call.1']
    #allocation10 [shape = 'u8[32768]{0}', space=vmem, size = 0x8000, scoped, tag = 'input window, operand 7, single buffered']
    #allocation11 [shape = 'u8[4096]{0}', space=vmem, size = 0x1000, scoped, tag = 'output window, operand 0, single buffered']
    %14 = vsyncpa [#allocation3], 0
    %15 = vsyncpa [#allocation6], 0
    %16 = vsyncpa [#allocation9], 0
    %17 = vsyncpa [#allocation4], 0
    // Predicated region
    $region2: #{tpu_custom_call.1} parent=1 // pred_check
      _
    $region3: #{tpu_custom_call.1} parent=1 // pred_check_branch
      %19 = sbr.rel (0) target = $region5
    $region4: #{tpu_custom_call.1} parent=1 // pred_region
      %s21 = ssub.s32 64, 64
      %22 = vsyncadd [#allocation3], %s21
      %s24 = sshll.u32 [#allocation2], 4
      %s25 = int_to_ptr.vmem [resolvable:$true] %s24
      %27 = dma.hbm_to_vmem [thread:$0]  %s0, 64, %s25, [#allocation3]
    $region5: #{tpu_custom_call.1} parent=1 // pred_fallthru
      _
    // Predicated region
    $region6: #{tpu_custom_call.1} parent=1 // pred_check
      _
    $region7: #{tpu_custom_call.1} parent=1 // pred_check_branch
      %29 = sbr.rel (0) target = $region9
    $region8: #{tpu_custom_call.1} parent=1 // pred_region
      %s31 = ssub.s32 384, 384
      %32 = vsyncadd [#allocation6], %s31
      %s33 = sshll.u32 [#allocation5], 4
      %s34 = int_to_ptr.vmem [resolvable:$true] %s33
      %39 = dma.hbm_to_vmem [thread:$0]  %s1, 384, %s34, [#allocation6], 64, 64, 4
    $region9: #{tpu_custom_call.1} parent=1 // pred_fallthru
      _
    // Predicated region
    $region10: #{tpu_custom_call.1} parent=1 // pred_check
      _
    $region11: #{tpu_custom_call.1} parent=1 // pred_check_branch
      %41 = sbr.rel (0) target = $region13
    $region12: #{tpu_custom_call.1} parent=1 // pred_region
      _
    $region13: #{tpu_custom_call.1} parent=1 // pred_fallthru
      _
    // Predicated region
    $region14: #{tpu_custom_call.1} parent=1 // pred_check
      _
    $region15: #{tpu_custom_call.1} parent=1 // pred_check_branch
      %43 = sbr.rel (0) target = $region17
    $region16: #{tpu_custom_call.1} parent=1 // pred_region
      %s45 = ssub.s32 1024, 1024
      %46 = vsyncadd [#allocation6], %s45
      %s47 = sshll.u32 [#allocation7], 4
      %s48 = int_to_ptr.vmem [resolvable:$true] %s47
      %53 = dma.hbm_to_vmem [thread:$0]  %s3, 1024, %s48, [#allocation6], 64, 64, 4
    $region17: #{tpu_custom_call.1} parent=1 // pred_fallthru
      _
    // Predicated region
    $region18: #{tpu_custom_call.1} parent=1 // pred_check
      _
    $region19: #{tpu_custom_call.1} parent=1 // pred_check_branch
      %55 = sbr.rel (0) target = $region21
    $region20: #{tpu_custom_call.1} parent=1 // pred_region
      _
    $region21: #{tpu_custom_call.1} parent=1 // pred_fallthru
      _
    // Predicated region
    $region22: #{tpu_custom_call.1} parent=1 // pred_check
      _
    $region23: #{tpu_custom_call.1} parent=1 // pred_check_branch
      %57 = sbr.rel (0) target = $region25
    $region24: #{tpu_custom_call.1} parent=1 // pred_region
      %s59 = ssub.s32 1024, 1024
      %60 = vsyncadd [#allocation9], %s59
      %s61 = sshll.u32 [#allocation8], 4
      %s62 = int_to_ptr.vmem [resolvable:$true] %s61
      %67 = dma.hbm_to_vmem [thread:$0]  %s5, 1024, %s62, [#allocation9], 64, 64, 4
    $region25: #{tpu_custom_call.1} parent=1 // pred_fallthru
      _
    // Predicated region
    $region26: #{tpu_custom_call.1} parent=1 // pred_check
      _
    $region27: #{tpu_custom_call.1} parent=1 // pred_check_branch
      %69 = sbr.rel (0) target = $region29
    $region28: #{tpu_custom_call.1} parent=1 // pred_region
      _
    $region29: #{tpu_custom_call.1} parent=1 // pred_fallthru
      _
    // Predicated region
    $region30: #{tpu_custom_call.1} parent=1 // pred_check
      _
    $region31: #{tpu_custom_call.1} parent=1 // pred_check_branch
      %71 = sbr.rel (0) target = $region33
    $region32: #{tpu_custom_call.1} parent=1 // pred_region
      %s73 = ssub.s32 1024, 1024
      %74 = vsyncadd [#allocation9], %s73
      %s75 = sshll.u32 [#allocation10], 4
      %s76 = int_to_ptr.vmem [resolvable:$true] %s75
      %81 = dma.hbm_to_vmem [thread:$0]  %s7, 1024, %s76, [#allocation9], 64, 64, 4
    $region33: #{tpu_custom_call.1} parent=1 // pred_fallthru
      _
    // Predicated region
    $region34: #{tpu_custom_call.1} parent=1 // pred_check
      _
    $region35: #{tpu_custom_call.1} parent=1 // pred_check_branch
      %83 = sbr.rel (0) target = $region37
    $region36: #{tpu_custom_call.1} parent=1 // pred_region
      _
    $region37: #{tpu_custom_call.1} parent=1 // pred_fallthru
      _
    // Predicated region
    $region38: #{tpu_custom_call.1} parent=1 // pred_check
      _
    $region39: #{tpu_custom_call.1} parent=1 // pred_check_branch
      %85 = sbr.rel (0) target = $region41
    $region40: #{tpu_custom_call.1} parent=1 // pred_region
      %86 = dma.done [#allocation3], 64
    $region41: #{tpu_custom_call.1} parent=1 // pred_fallthru
      _
    // Predicated region
    $region42: #{tpu_custom_call.1} parent=1 // pred_check
      _
    $region43: #{tpu_custom_call.1} parent=1 // pred_check_branch
      %88 = sbr.rel (0) target = $region45
    $region44: #{tpu_custom_call.1} parent=1 // pred_region
      %89 = dma.done [#allocation6], 384
    $region45: #{tpu_custom_call.1} parent=1 // pred_fallthru
      _
    // Predicated region
    $region46: #{tpu_custom_call.1} parent=1 // pred_check
      _
    $region47: #{tpu_custom_call.1} parent=1 // pred_check_branch
      %91 = sbr.rel (0) target = $region49
    $region48: #{tpu_custom_call.1} parent=1 // pred_region
      %92 = dma.done [#allocation6], 1024
    $region49: #{tpu_custom_call.1} parent=1 // pred_fallthru
      _
    // Predicated region
    $region50: #{tpu_custom_call.1} parent=1 // pred_check
      _
    $region51: #{tpu_custom_call.1} parent=1 // pred_check_branch
      %94 = sbr.rel (0) target = $region53
    $region52: #{tpu_custom_call.1} parent=1 // pred_region
      %95 = dma.done [#allocation9], 1024
    $region53: #{tpu_custom_call.1} parent=1 // pred_fallthru
      _
    // Predicated region
    $region54: #{tpu_custom_call.1} parent=1 // pred_check
      _
    $region55: #{tpu_custom_call.1} parent=1 // pred_check_branch
      %97 = sbr.rel (0) target = $region57
    $region56: #{tpu_custom_call.1} parent=1 // pred_region
      %98 = dma.done [#allocation9], 1024
    $region57: #{tpu_custom_call.1} parent=1 // pred_fallthru
      _
    %v100 = vld [vmem:[#allocation2] sm:$0xf]
    %v101 = vld [vmem:[#allocation5] sm:$0xf]
    %v102 = vld [vmem:[#allocation5 + $0x4] sm:$0xf]
    %v103 = vld [vmem:[#allocation5 + $0x8] sm:$0xf]
    %v104 = vld [vmem:[#allocation5 + $0xc] sm:$0xf]
    %v105 = vld [vmem:[#allocation5 + $0x10] sm:$0xf]
    %v106 = vld [vmem:[#allocation5 + $0x14] sm:$0xf]
    %v107 = vld [vmem:[%s2] sm:$0x1]
    %v109 = vlaneseq
    %v110 = vshrl.u32 %v109, 7
    %v111 = vsub.s32 0, %v110
    %v112 = vrot.slane %v107, %v111
    %v120 = vunpack.c.l.b16 %v101
    %v121 = vunpack.c.l.b16 %v102
    %v122 = vunpack.c.l.b16 %v103
    %v123 = vunpack.c.l.b16 %v104
    %v124 = vunpack.c.l.b16 %v105
    %v125 = vunpack.c.l.b16 %v106
    %v126 = vpack.c.b16 %v121, %v120
    %v127 = vpack.c.b16 %v123, %v122
    %v128 = vpack.c.b16 %v125, %v124
    %vm132 = vcmask 392192
    %v134 = vsel %vm132, %v100, 0
    %136 = vmatprep.subr.bf16.mxu0 0
    %137 = vmatpush1.bf16.msra.mxu0 %v126
    %138 = vmatprep.subr.bf16.mxu0 0
    %139 = vmatpush1.bf16.msra.mxu0 %v127
    %140 = vmatprep.subr.bf16.mxu0 0
    %141 = vmatpush1.bf16.msra.mxu0 %v128
    %142 = vmatprep.subr.bf16.mxu0 0
    %143 = vmatpush1.bf16.msra.mxu0 0
    %144 = vmatprep.subr.bf16.mxu0 0
    %145 = vmatpush1.bf16.msra.mxu0 0
    %146 = vmatprep.subr.bf16.mxu0 0
    %147 = vmatpush1.bf16.msra.mxu0 0
    %148 = vmatprep.subr.bf16.mxu0 0
    %149 = vmatpush1.bf16.msra.mxu0 0
    %150 = vmatprep.subr.bf16.mxu0 0
    %151 = vmatpush1.bf16.msra.mxu0 0
    %152 = vmatprep.subr.bf16.mxu0 0
    %153 = vmatpush1.bf16.msra.mxu0 0
    %154 = vmatprep.subr.bf16.mxu0 0
    %155 = vmatpush1.bf16.msra.mxu0 0
    %156 = vmatprep.subr.bf16.mxu0 0
    %157 = vmatpush1.bf16.msra.mxu0 0
    %158 = vmatprep.subr.bf16.mxu0 0
    %159 = vmatpush1.bf16.msra.mxu0 0
    %160 = vmatprep.subr.bf16.mxu0 0
    %161 = vmatpush1.bf16.msra.mxu0 0
    %162 = vmatprep.subr.bf16.mxu0 0
    %163 = vmatpush1.bf16.msra.mxu0 0
    %164 = vmatprep.subr.bf16.mxu0 0
    %165 = vmatpush1.bf16.msra.mxu0 0
    %166 = vmatprep.subr.bf16.mxu0 0
    %167 = vmatpush1.bf16.msra.mxu0 0
    %168 = vmatprep.mubr.bf16.mxu0 0
    %169 = vmatmul.mubr.bf16.gmra.mrb[0].mxu0 %v134
    %v170 = vpop.f32.mrb[0].mxu0
    %v171 = vadd.f32 %v112, %v170
    %v172 = vpop.f32.mrb[0].mxu0
    %v173 = vpop.f32.mrb[0].mxu0
    %v174 = vpop.f32.mrb[0].mxu0
    %175 = vdwg.mxu0
    %v176 = vmax.f32 %v171, 0.0
    %v177 = vpack.c.bf16 %v176, %v176
    %v178 = vld [vmem:[#allocation7] sm:$0xf]
    %v179 = vld [vmem:[#allocation7 + $0x4] sm:$0xf]
    %v180 = vld [vmem:[#allocation7 + $0x8] sm:$0xf]
    %v181 = vld [vmem:[#allocation7 + $0xc] sm:$0xf]
    %v182 = vld [vmem:[#allocation7 + $0x10] sm:$0xf]
    %v183 = vld [vmem:[#allocation7 + $0x14] sm:$0xf]
    %v184 = vld [vmem:[#allocation7 + $0x18] sm:$0xf]
    %v185 = vld [vmem:[#allocation7 + $0x1c] sm:$0xf]
    %v186 = vld [vmem:[#allocation7 + $0x20] sm:$0xf]
    %v187 = vld [vmem:[#allocation7 + $0x24] sm:$0xf]
    %v188 = vld [vmem:[#allocation7 + $0x28] sm:$0xf]
    %v189 = vld [vmem:[#allocation7 + $0x2c] sm:$0xf]
    %v190 = vld [vmem:[#allocation7 + $0x30] sm:$0xf]
    %v191 = vld [vmem:[#allocation7 + $0x34] sm:$0xf]
    %v192 = vld [vmem:[#allocation7 + $0x38] sm:$0xf]
    %v193 = vld [vmem:[#allocation7 + $0x3c] sm:$0xf]
    %v194 = vld [vmem:[%s4] sm:$0x1]
    %v196 = vlaneseq
    %v197 = vshrl.u32 %v196, 7
    %v198 = vsub.s32 0, %v197
    %v199 = vrot.slane %v194, %v198
    %v217 = vunpack.c.l.b16 %v178
    %v218 = vunpack.c.l.b16 %v179
    %v219 = vunpack.c.l.b16 %v180
    %v220 = vunpack.c.l.b16 %v181
    %v221 = vunpack.c.l.b16 %v182
    %v222 = vunpack.c.l.b16 %v183
    %v223 = vunpack.c.l.b16 %v184
    %v224 = vunpack.c.l.b16 %v185
    %v225 = vunpack.c.l.b16 %v186
    %v226 = vunpack.c.l.b16 %v187
    %v227 = vunpack.c.l.b16 %v188
    %v228 = vunpack.c.l.b16 %v189
    %v229 = vunpack.c.l.b16 %v190
    %v230 = vunpack.c.l.b16 %v191
    %v231 = vunpack.c.l.b16 %v192
    %v232 = vunpack.c.l.b16 %v193
    %v233 = vpack.c.b16 %v218, %v217
    %v234 = vpack.c.b16 %v220, %v219
    %v235 = vpack.c.b16 %v222, %v221
    %v236 = vpack.c.b16 %v224, %v223
    %v237 = vpack.c.b16 %v226, %v225
    %v238 = vpack.c.b16 %v228, %v227
    %v239 = vpack.c.b16 %v230, %v229
    %v240 = vpack.c.b16 %v232, %v231
    %249 = vmatprep.subr.bf16.mxu0 0
    %250 = vmatpush1.bf16.msra.mxu0 %v233
    %251 = vmatprep.subr.bf16.mxu0 0
    %252 = vmatpush1.bf16.msra.mxu0 %v234
    %253 = vmatprep.subr.bf16.mxu0 0
    %254 = vmatpush1.bf16.msra.mxu0 %v235
    %255 = vmatprep.subr.bf16.mxu0 0
    %256 = vmatpush1.bf16.msra.mxu0 %v236
    %257 = vmatprep.subr.bf16.mxu0 0
    %258 = vmatpush1.bf16.msra.mxu0 %v237
    %259 = vmatprep.subr.bf16.mxu0 0
    %260 = vmatpush1.bf16.msra.mxu0 %v238
    %261 = vmatprep.subr.bf16.mxu0 0
    %262 = vmatpush1.bf16.msra.mxu0 %v239
    %263 = vmatprep.subr.bf16.mxu0 0
    %264 = vmatpush1.bf16.msra.mxu0 %v240
    %265 = vmatprep.subr.bf16.mxu0 0
    %266 = vmatpush1.bf16.msra.mxu0 0
    %267 = vmatprep.subr.bf16.mxu0 0
    %268 = vmatpush1.bf16.msra.mxu0 0
    %269 = vmatprep.subr.bf16.mxu0 0
    %270 = vmatpush1.bf16.msra.mxu0 0
    %271 = vmatprep.subr.bf16.mxu0 0
    %272 = vmatpush1.bf16.msra.mxu0 0
    %273 = vmatprep.subr.bf16.mxu0 0
    %274 = vmatpush1.bf16.msra.mxu0 0
    %275 = vmatprep.subr.bf16.mxu0 0
    %276 = vmatpush1.bf16.msra.mxu0 0
    %277 = vmatprep.subr.bf16.mxu0 0
    %278 = vmatpush1.bf16.msra.mxu0 0
    %279 = vmatprep.subr.bf16.mxu0 0
    %280 = vmatpush1.bf16.msra.mxu0 0
    %281 = vmatprep.mubr.bf16.mxu0 0
    %282 = vmatmul.mubr.bf16.gmra.mrb[0].mxu0 %v177
    %v283 = vpop.f32.mrb[0].mxu0
    %v284 = vadd.f32 %v199, %v283
    %v285 = vpop.f32.mrb[0].mxu0
    %v286 = vpop.f32.mrb[0].mxu0
    %v287 = vpop.f32.mrb[0].mxu0
    %288 = vdwg.mxu0
    %v289 = vmax.f32 %v284, 0.0
    %v290 = vpack.c.bf16 %v289, %v289
    %v291 = vld [vmem:[#allocation8] sm:$0xf]
    %v292 = vld [vmem:[#allocation8 + $0x4] sm:$0xf]
    %v293 = vld [vmem:[#allocation8 + $0x8] sm:$0xf]
    %v294 = vld [vmem:[#allocation8 + $0xc] sm:$0xf]
    %v295 = vld [vmem:[#allocation8 + $0x10] sm:$0xf]
    %v296 = vld [vmem:[#allocation8 + $0x14] sm:$0xf]
    %v297 = vld [vmem:[#allocation8 + $0x18] sm:$0xf]
    %v298 = vld [vmem:[#allocation8 + $0x1c] sm:$0xf]
    %v299 = vld [vmem:[#allocation8 + $0x20] sm:$0xf]
    %v300 = vld [vmem:[#allocation8 + $0x24] sm:$0xf]
    %v301 = vld [vmem:[#allocation8 + $0x28] sm:$0xf]
    %v302 = vld [vmem:[#allocation8 + $0x2c] sm:$0xf]
    %v303 = vld [vmem:[#allocation8 + $0x30] sm:$0xf]
    %v304 = vld [vmem:[#allocation8 + $0x34] sm:$0xf]
    %v305 = vld [vmem:[#allocation8 + $0x38] sm:$0xf]
    %v306 = vld [vmem:[#allocation8 + $0x3c] sm:$0xf]
    %v307 = vld [vmem:[%s6] sm:$0x1]
    %v309 = vlaneseq
    %v310 = vshrl.u32 %v309, 7
    %v311 = vsub.s32 0, %v310
    %v312 = vrot.slane %v307, %v311
    %v330 = vunpack.c.l.b16 %v291
    %v331 = vunpack.c.l.b16 %v292
    %v332 = vunpack.c.l.b16 %v293
    %v333 = vunpack.c.l.b16 %v294
    %v334 = vunpack.c.l.b16 %v295
    %v335 = vunpack.c.l.b16 %v296
    %v336 = vunpack.c.l.b16 %v297
    %v337 = vunpack.c.l.b16 %v298
    %v338 = vunpack.c.l.b16 %v299
    %v339 = vunpack.c.l.b16 %v300
    %v340 = vunpack.c.l.b16 %v301
    %v341 = vunpack.c.l.b16 %v302
    %v342 = vunpack.c.l.b16 %v303
    %v343 = vunpack.c.l.b16 %v304
    %v344 = vunpack.c.l.b16 %v305
    %v345 = vunpack.c.l.b16 %v306
    %v346 = vpack.c.b16 %v331, %v330
    %v347 = vpack.c.b16 %v333, %v332
    %v348 = vpack.c.b16 %v335, %v334
    %v349 = vpack.c.b16 %v337, %v336
    %v350 = vpack.c.b16 %v339, %v338
    %v351 = vpack.c.b16 %v341, %v340
    %v352 = vpack.c.b16 %v343, %v342
    %v353 = vpack.c.b16 %v345, %v344
    %362 = vmatprep.subr.bf16.mxu0 0
    %363 = vmatpush1.bf16.msra.mxu0 %v346
    %364 = vmatprep.subr.bf16.mxu0 0
    %365 = vmatpush1.bf16.msra.mxu0 %v347
    %366 = vmatprep.subr.bf16.mxu0 0
    %367 = vmatpush1.bf16.msra.mxu0 %v348
    %368 = vmatprep.subr.bf16.mxu0 0
    %369 = vmatpush1.bf16.msra.mxu0 %v349
    %370 = vmatprep.subr.bf16.mxu0 0
    %371 = vmatpush1.bf16.msra.mxu0 %v350
    %372 = vmatprep.subr.bf16.mxu0 0
    %373 = vmatpush1.bf16.msra.mxu0 %v351
    %374 = vmatprep.subr.bf16.mxu0 0
    %375 = vmatpush1.bf16.msra.mxu0 %v352
    %376 = vmatprep.subr.bf16.mxu0 0
    %377 = vmatpush1.bf16.msra.mxu0 %v353
    %378 = vmatprep.subr.bf16.mxu0 0
    %379 = vmatpush1.bf16.msra.mxu0 0
    %380 = vmatprep.subr.bf16.mxu0 0
    %381 = vmatpush1.bf16.msra.mxu0 0
    %382 = vmatprep.subr.bf16.mxu0 0
    %383 = vmatpush1.bf16.msra.mxu0 0
    %384 = vmatprep.subr.bf16.mxu0 0
    %385 = vmatpush1.bf16.msra.mxu0 0
    %386 = vmatprep.subr.bf16.mxu0 0
    %387 = vmatpush1.bf16.msra.mxu0 0
    %388 = vmatprep.subr.bf16.mxu0 0
    %389 = vmatpush1.bf16.msra.mxu0 0
    %390 = vmatprep.subr.bf16.mxu0 0
    %391 = vmatpush1.bf16.msra.mxu0 0
    %392 = vmatprep.subr.bf16.mxu0 0
    %393 = vmatpush1.bf16.msra.mxu0 0
    %394 = vmatprep.mubr.bf16.mxu0 0
    %395 = vmatmul.mubr.bf16.gmra.mrb[0].mxu0 %v290
    %v396 = vpop.f32.mrb[0].mxu0
    %v397 = vadd.f32 %v312, %v396
    %v398 = vpop.f32.mrb[0].mxu0
    %v399 = vpop.f32.mrb[0].mxu0
    %v400 = vpop.f32.mrb[0].mxu0
    %401 = vdwg.mxu0
    %v402 = vmax.f32 %v397, 0.0
    %v403 = vpack.c.bf16 %v402, %v402
    %v404 = vld [vmem:[#allocation10] sm:$0xf]
    %v405 = vld [vmem:[#allocation10 + $0x4] sm:$0xf]
    %v406 = vld [vmem:[#allocation10 + $0x8] sm:$0xf]
    %v407 = vld [vmem:[#allocation10 + $0xc] sm:$0xf]
    %v408 = vld [vmem:[#allocation10 + $0x10] sm:$0xf]
    %v409 = vld [vmem:[#allocation10 + $0x14] sm:$0xf]
    %v410 = vld [vmem:[#allocation10 + $0x18] sm:$0xf]
    %v411 = vld [vmem:[#allocation10 + $0x1c] sm:$0xf]
    %v412 = vld [vmem:[#allocation10 + $0x20] sm:$0xf]
    %v413 = vld [vmem:[#allocation10 + $0x24] sm:$0xf]
    %v414 = vld [vmem:[#allocation10 + $0x28] sm:$0xf]
    %v415 = vld [vmem:[#allocation10 + $0x2c] sm:$0xf]
    %v416 = vld [vmem:[#allocation10 + $0x30] sm:$0xf]
    %v417 = vld [vmem:[#allocation10 + $0x34] sm:$0xf]
    %v418 = vld [vmem:[#allocation10 + $0x38] sm:$0xf]
    %v419 = vld [vmem:[#allocation10 + $0x3c] sm:$0xf]
    %v420 = vld [vmem:[%s8] sm:$0x1]
    %v422 = vlaneseq
    %v423 = vshrl.u32 %v422, 7
    %v424 = vsub.s32 0, %v423
    %v425 = vrot.slane %v420, %v424
    %v443 = vunpack.c.l.b16 %v404
    %v444 = vunpack.c.l.b16 %v405
    %v445 = vunpack.c.l.b16 %v406
    %v446 = vunpack.c.l.b16 %v407
    %v447 = vunpack.c.l.b16 %v408
    %v448 = vunpack.c.l.b16 %v409
    %v449 = vunpack.c.l.b16 %v410
    %v450 = vunpack.c.l.b16 %v411
    %v451 = vunpack.c.l.b16 %v412
    %v452 = vunpack.c.l.b16 %v413
    %v453 = vunpack.c.l.b16 %v414
    %v454 = vunpack.c.l.b16 %v415
    %v455 = vunpack.c.l.b16 %v416
    %v456 = vunpack.c.l.b16 %v417
    %v457 = vunpack.c.l.b16 %v418
    %v458 = vunpack.c.l.b16 %v419
    %v459 = vpack.c.b16 %v444, %v443
    %v460 = vpack.c.b16 %v446, %v445
    %v461 = vpack.c.b16 %v448, %v447
    %v462 = vpack.c.b16 %v450, %v449
    %v463 = vpack.c.b16 %v452, %v451
    %v464 = vpack.c.b16 %v454, %v453
    %v465 = vpack.c.b16 %v456, %v455
    %v466 = vpack.c.b16 %v458, %v457
    %475 = vmatprep.subr.bf16.mxu0 0
    %476 = vmatpush1.bf16.msra.mxu0 %v459
    %477 = vmatprep.subr.bf16.mxu0 0
    %478 = vmatpush1.bf16.msra.mxu0 %v460
    %479 = vmatprep.subr.bf16.mxu0 0
    %480 = vmatpush1.bf16.msra.mxu0 %v461
    %481 = vmatprep.subr.bf16.mxu0 0
    %482 = vmatpush1.bf16.msra.mxu0 %v462
    %483 = vmatprep.subr.bf16.mxu0 0
    %484 = vmatpush1.bf16.msra.mxu0 %v463
    %485 = vmatprep.subr.bf16.mxu0 0
    %486 = vmatpush1.bf16.msra.mxu0 %v464
    %487 = vmatprep.subr.bf16.mxu0 0
    %488 = vmatpush1.bf16.msra.mxu0 %v465
    %489 = vmatprep.subr.bf16.mxu0 0
    %490 = vmatpush1.bf16.msra.mxu0 %v466
    %491 = vmatprep.subr.bf16.mxu0 0
    %492 = vmatpush1.bf16.msra.mxu0 0
    %493 = vmatprep.subr.bf16.mxu0 0
    %494 = vmatpush1.bf16.msra.mxu0 0
    %495 = vmatprep.subr.bf16.mxu0 0
    %496 = vmatpush1.bf16.msra.mxu0 0
    %497 = vmatprep.subr.bf16.mxu0 0
    %498 = vmatpush1.bf16.msra.mxu0 0
    %499 = vmatprep.subr.bf16.mxu0 0
    %500 = vmatpush1.bf16.msra.mxu0 0
    %501 = vmatprep.subr.bf16.mxu0 0
    %502 = vmatpush1.bf16.msra.mxu0 0
    %503 = vmatprep.subr.bf16.mxu0 0
    %504 = vmatpush1.bf16.msra.mxu0 0
    %505 = vmatprep.subr.bf16.mxu0 0
    %506 = vmatpush1.bf16.msra.mxu0 0
    %507 = vmatprep.mubr.bf16.mxu0 0
    %508 = vmatmul.mubr.bf16.gmra.mrb[0].mxu0 %v403
    %v509 = vpop.f32.mrb[0].mxu0
    %v510 = vadd.f32 %v425, %v509
    %v511 = vpop.f32.mrb[0].mxu0
    %v512 = vpop.f32.mrb[0].mxu0
    %v513 = vpop.f32.mrb[0].mxu0
    %514 = vdwg.mxu0
    %v515 = vmax.f32 %v510, -5.0
    %v516 = vmin.f32 %v515, 5.0
    %517 = vst [vmem:[#allocation11] sm:$0xff] %v516
    // Predicated region
    $region58: #{tpu_custom_call.1} parent=1 // pred_check
      _
    $region59: #{tpu_custom_call.1} parent=1 // pred_check_branch
      %519 = sbr.rel (0) target = $region61
    $region60: #{tpu_custom_call.1} parent=1 // pred_region
      %s521 = ssub.s32 128, 128
      %522 = vsyncadd [#allocation4], %s521
      %s524 = sshll.u32 [#allocation11], 4
      %s525 = int_to_ptr.vmem [resolvable:$true] %s524
      %527 = dma.vmem_to_hbm [thread:$0]  %s525, 128, %s9, [#allocation4]
    $region61: #{tpu_custom_call.1} parent=1 // pred_fallthru
      _
    // Predicated region
    $region62: #{tpu_custom_call.1} parent=1 // pred_check
      _
    $region63: #{tpu_custom_call.1} parent=1 // pred_check_branch
      %529 = sbr.rel (0) target = $region65
    $region64: #{tpu_custom_call.1} parent=1 // pred_region
      %530 = dma.done [#allocation4], 128
    $region65: #{tpu_custom_call.1} parent=1 // pred_fallthru
      _
    %531 = vsyncpa [#allocation3], 1
    %532 = vsyncpa [#allocation6], 1
    %533 = vsyncpa [#allocation9], 1
    %534 = vsyncpa [#allocation4], 1

</llo_original>
